<compile_context>
chip_gen: v6e
topology: v6e:2x2x1
jax: 0.10.0
libtpu: 0.0.40
codegen_flags: <defaults>
</compile_context>

<pallas_src>
import functools

import jax
import jax.numpy as jnp
from jax.experimental import pallas as pl
from jax.experimental.pallas import tpu as pltpu


def _nlpcc_kernel(x_ref, y_ref, o_ref,
                  sx_ref, sy_ref, sxy_ref, sxx_ref, syy_ref,
                  *, inv_hw, inv_c):
    h = pl.program_id(1)
    num_h = pl.num_programs(1)

    @pl.when(h == 0)
    def _():
        sx_ref[...] = jnp.zeros_like(sx_ref)
        sy_ref[...] = jnp.zeros_like(sy_ref)
        sxy_ref[...] = jnp.zeros_like(sxy_ref)
        sxx_ref[...] = jnp.zeros_like(sxx_ref)
        syy_ref[...] = jnp.zeros_like(syy_ref)

    x = x_ref[0].astype(jnp.float32)   # (C, TILE_HW)
    y = y_ref[0].astype(jnp.float32)   # (C, TILE_HW)

    # One-pass moment accumulation (per channel).
    sx_ref[...] += jnp.sum(x, axis=-1, keepdims=True)
    sy_ref[...] += jnp.sum(y, axis=-1, keepdims=True)
    sxy_ref[...] += jnp.sum(x * y, axis=-1, keepdims=True)
    sxx_ref[...] += jnp.sum(x * x, axis=-1, keepdims=True)
    syy_ref[...] += jnp.sum(y * y, axis=-1, keepdims=True)

    @pl.when(h == num_h - 1)
    def _():
        sx = sx_ref[...]
        sy = sy_ref[...]
        cov_xy = sxy_ref[...] - sx * sy * inv_hw
        var_x = jnp.maximum(sxx_ref[...] - sx * sx * inv_hw, 0.0)
        var_y = jnp.maximum(syy_ref[...] - sy * sy * inv_hw, 0.0)
        # cov_xy / (sqrt(var_x) * sqrt(var_y)); rsqrt goes to the EUP slot.
        pcc = cov_xy * jax.lax.rsqrt(var_x * var_y)                      # (C, 1)
        loss = 1.0 - jnp.sum(pcc, axis=(0, 1), keepdims=True) * inv_c    # (1, 1)
        o_ref[0] = loss


def nlpcc_loss(X, Y, *, target_block_bytes=2 << 20):
    """X, Y: (N, C, H, W) -> scalar loss (matches NLPCC.forward)."""
    assert X.shape == Y.shape and X.ndim == 4
    N, C, H, W = X.shape
    HW = H * W
    itemsize = jnp.dtype(X.dtype).itemsize

    LANE = 128
    hw_lane = pl.cdiv(HW, LANE) * LANE
    # ~target_block_bytes per input block, lane aligned, at least one vreg row.
    max_tile = max(LANE, (target_block_bytes // max(C * itemsize, 1)) // LANE * LANE)
    tile_hw = min(hw_lane, max_tile)
    num_hw_tiles = pl.cdiv(HW, tile_hw)
    hw_pad = num_hw_tiles * tile_hw

    x2 = X.reshape(N, C, HW)
    y2 = Y.reshape(N, C, HW)
    if hw_pad != HW:
        pad = ((0, 0), (0, 0), (0, hw_pad - HW))
        x2 = jnp.pad(x2, pad)   # zeros do not perturb the moment sums
        y2 = jnp.pad(y2, pad)

    # 2 inputs x 2 pipeline buffers of the per-step block, plus headroom;
    # cap at 48 MiB so the same code stays within v7x's 64 MiB physical VMEM.
    block_bytes = C * tile_hw * itemsize
    vmem_limit = int(min(max(4 * block_bytes + (4 << 20), 16 << 20), 48 << 20))

    kernel = functools.partial(_nlpcc_kernel, inv_hw=1.0 / HW, inv_c=1.0 / C)

    per_sample = pl.pallas_call(
        kernel,
        out_shape=jax.ShapeDtypeStruct((N, 1, 1), jnp.float32),
        grid_spec=pltpu.PrefetchScalarGridSpec(
            num_scalar_prefetch=0,
            grid=(N, num_hw_tiles),
            in_specs=[
                pl.BlockSpec((1, C, tile_hw), lambda n, h: (n, 0, h)),
                pl.BlockSpec((1, C, tile_hw), lambda n, h: (n, 0, h)),
            ],
            out_specs=pl.BlockSpec((1, 1, 1), lambda n, h: (n, 0, 0)),
            scratch_shapes=[pltpu.VMEM((C, 1), jnp.float32)] * 5,
        ),
        compiler_params=pltpu.CompilerParams(
            dimension_semantics=("parallel", "arbitrary"),
            vmem_limit_bytes=vmem_limit,
        ),
        cost_estimate=pl.CostEstimate(
            flops=int(8 * N * C * HW),
            transcendentals=int(2 * N * C),
            bytes_accessed=int(2 * N * C * HW * itemsize + N * 4),
        ),
    )(x2, y2)

    # Batch mean in the wrapper (keeps the batch grid axis fully parallel).
    return jnp.mean(per_sample[:, 0, 0])


def _nlpcc_ref(X, Y):
    Xc = X - jnp.mean(X, axis=(2, 3), keepdims=True)
    Yc = Y - jnp.mean(Y, axis=(2, 3), keepdims=True)
    cov_xy = jnp.sum(Xc * Yc, axis=(2, 3))
    cov_x = jnp.sqrt(jnp.sum(Xc ** 2, axis=(2, 3)))
    cov_y = jnp.sqrt(jnp.sum(Yc ** 2, axis=(2, 3)))
    pcc = cov_xy / (cov_x * cov_y)
    return jnp.mean(1.0 - jnp.mean(pcc, axis=1), axis=0)


if __name__ == "__main__":
    key = jax.random.PRNGKey(0)
    kx, ky = jax.random.split(key)
    N, C, H, W = 2, 4, 16, 16
    X = jax.random.normal(kx, (N, C, H, W), dtype=jnp.float32)
    Y = 0.5 * X + 0.5 * jax.random.normal(ky, (N, C, H, W), dtype=jnp.float32)

    loss = jax.block_until_ready(nlpcc_loss(X, Y))
    ref = jax.block_until_ready(_nlpcc_ref(X, Y))

    assert jnp.allclose(loss, ref, atol=1e-4, rtol=1e-4), (loss, ref)
    print("KERNEL_OK")
</pallas_src>

<mosaic_0001>
module attributes {stable_mosaic.version = 11 : i64} {
  func.func @_nlpcc_kernel(%arg0: i32, %arg1: i32, %arg2: memref<1x4x256xf32, #tpu.memory_space<vmem>>, %arg3: memref<1x4x256xf32, #tpu.memory_space<vmem>>, %arg4: memref<1x1x1xf32, #tpu.memory_space<vmem>>, %arg5: memref<4x1xf32, #tpu.memory_space<vmem>>, %arg6: memref<4x1xf32, #tpu.memory_space<vmem>>, %arg7: memref<4x1xf32, #tpu.memory_space<vmem>>, %arg8: memref<4x1xf32, #tpu.memory_space<vmem>>, %arg9: memref<4x1xf32, #tpu.memory_space<vmem>>) attributes {dimension_semantics = [#tpu.dimension_semantics<parallel>, #tpu.dimension_semantics<arbitrary>], iteration_bounds = array<i64: 2, 1>, scalar_prefetch = 0 : i64, scratch_operands = 5 : i64, tpu.core_type = #tpu.core_type<tc>, window_params = [{transform_indices = @transform_0, window_bounds = array<i64: 1, 4, 256>}, {transform_indices = @transform_1, window_bounds = array<i64: 1, 4, 256>}, {transform_indices = @transform_2, window_bounds = array<i64: 1, 1, 1>}]} {
    %c0_i32 = arith.constant 0 : i32
    %0 = arith.cmpi eq, %arg1, %c0_i32 : i32
    %1 = arith.extui %0 : i1 to i32
    %c0_i32_0 = arith.constant 0 : i32
    %2 = arith.cmpi ne, %1, %c0_i32_0 : i32
    scf.if %2 {
      %cst_32 = arith.constant 0.000000e+00 : f32
      %38 = vector.broadcast %cst_32 : f32 to vector<4x1xf32>
      %c0_33 = arith.constant 0 : index
      %c0_34 = arith.constant 0 : index
      %39 = vector.load %arg5[%c0_33, %c0_34] : memref<4x1xf32, #tpu.memory_space<vmem>>, vector<4x1xf32>
      tpu.vector_store %arg5[%c0_33, %c0_34], %38 {strides = array<i32>} : memref<4x1xf32, #tpu.memory_space<vmem>>, vector<4x1xf32>,
      %cst_35 = arith.constant 0.000000e+00 : f32
      %40 = vector.broadcast %cst_35 : f32 to vector<4x1xf32>
      %c0_36 = arith.constant 0 : index
      %c0_37 = arith.constant 0 : index
      %41 = vector.load %arg6[%c0_36, %c0_37] : memref<4x1xf32, #tpu.memory_space<vmem>>, vector<4x1xf32>
      tpu.vector_store %arg6[%c0_36, %c0_37], %40 {strides = array<i32>} : memref<4x1xf32, #tpu.memory_space<vmem>>, vector<4x1xf32>,
      %cst_38 = arith.constant 0.000000e+00 : f32
      %42 = vector.broadcast %cst_38 : f32 to vector<4x1xf32>
      %c0_39 = arith.constant 0 : index
      %c0_40 = arith.constant 0 : index
      %43 = vector.load %arg7[%c0_39, %c0_40] : memref<4x1xf32, #tpu.memory_space<vmem>>, vector<4x1xf32>
      tpu.vector_store %arg7[%c0_39, %c0_40], %42 {strides = array<i32>} : memref<4x1xf32, #tpu.memory_space<vmem>>, vector<4x1xf32>,
      %cst_41 = arith.constant 0.000000e+00 : f32
      %44 = vector.broadcast %cst_41 : f32 to vector<4x1xf32>
      %c0_42 = arith.constant 0 : index
      %c0_43 = arith.constant 0 : index
      %45 = vector.load %arg8[%c0_42, %c0_43] : memref<4x1xf32, #tpu.memory_space<vmem>>, vector<4x1xf32>
      tpu.vector_store %arg8[%c0_42, %c0_43], %44 {strides = array<i32>} : memref<4x1xf32, #tpu.memory_space<vmem>>, vector<4x1xf32>,
      %cst_44 = arith.constant 0.000000e+00 : f32
      %46 = vector.broadcast %cst_44 : f32 to vector<4x1xf32>
      %c0_45 = arith.constant 0 : index
      %c0_46 = arith.constant 0 : index
      %47 = vector.load %arg9[%c0_45, %c0_46] : memref<4x1xf32, #tpu.memory_space<vmem>>, vector<4x1xf32>
      tpu.vector_store %arg9[%c0_45, %c0_46], %46 {strides = array<i32>} : memref<4x1xf32, #tpu.memory_space<vmem>>, vector<4x1xf32>,
    } else {
    }
    %c0 = arith.constant 0 : index
    %c0_1 = arith.constant 0 : index
    %c0_2 = arith.constant 0 : index
    %3 = vector.load %arg2[%c0, %c0_1, %c0_2] : memref<1x4x256xf32, #tpu.memory_space<vmem>>, vector<1x4x256xf32>
    %4 = vector.shape_cast %3 : vector<1x4x256xf32> to vector<4x256xf32>
    %c0_3 = arith.constant 0 : index
    %c0_4 = arith.constant 0 : index
    %c0_5 = arith.constant 0 : index
    %5 = vector.load %arg3[%c0_3, %c0_4, %c0_5] : memref<1x4x256xf32, #tpu.memory_space<vmem>>, vector<1x4x256xf32>
    %6 = vector.shape_cast %5 : vector<1x4x256xf32> to vector<4x256xf32>
    %c0_6 = arith.constant 0 : index
    %c0_7 = arith.constant 0 : index
    %7 = vector.load %arg5[%c0_6, %c0_7] : memref<4x1xf32, #tpu.memory_space<vmem>>, vector<4x1xf32>
    %cst = arith.constant dense<0.000000e+00> : vector<4xf32>
    %8 = vector.multi_reduction <add>, %4, %cst [1] : vector<4x256xf32> to vector<4xf32>
    %9 = vector.shape_cast %8 : vector<4xf32> to vector<4x1xf32>
    %10 = arith.addf %7, %9 : vector<4x1xf32>
    %c0_8 = arith.constant 0 : index
    %c0_9 = arith.constant 0 : index
    %11 = vector.load %arg5[%c0_8, %c0_9] : memref<4x1xf32, #tpu.memory_space<vmem>>, vector<4x1xf32>
    tpu.vector_store %arg5[%c0_8, %c0_9], %10 {strides = array<i32>} : memref<4x1xf32, #tpu.memory_space<vmem>>, vector<4x1xf32>,
    %c0_10 = arith.constant 0 : index
    %c0_11 = arith.constant 0 : index
    %12 = vector.load %arg6[%c0_10, %c0_11] : memref<4x1xf32, #tpu.memory_space<vmem>>, vector<4x1xf32>
    %cst_12 = arith.constant dense<0.000000e+00> : vector<4xf32>
    %13 = vector.multi_reduction <add>, %6, %cst_12 [1] : vector<4x256xf32> to vector<4xf32>
    %14 = vector.shape_cast %13 : vector<4xf32> to vector<4x1xf32>
    %15 = arith.addf %12, %14 : vector<4x1xf32>
    %c0_13 = arith.constant 0 : index
    %c0_14 = arith.constant 0 : index
    %16 = vector.load %arg6[%c0_13, %c0_14] : memref<4x1xf32, #tpu.memory_space<vmem>>, vector<4x1xf32>
    tpu.vector_store %arg6[%c0_13, %c0_14], %15 {strides = array<i32>} : memref<4x1xf32, #tpu.memory_space<vmem>>, vector<4x1xf32>,
    %c0_15 = arith.constant 0 : index
    %c0_16 = arith.constant 0 : index
    %17 = vector.load %arg7[%c0_15, %c0_16] : memref<4x1xf32, #tpu.memory_space<vmem>>, vector<4x1xf32>
    %18 = arith.mulf %4, %6 : vector<4x256xf32>
    %cst_17 = arith.constant dense<0.000000e+00> : vector<4xf32>
    %19 = vector.multi_reduction <add>, %18, %cst_17 [1] : vector<4x256xf32> to vector<4xf32>
    %20 = vector.shape_cast %19 : vector<4xf32> to vector<4x1xf32>
    %21 = arith.addf %17, %20 : vector<4x1xf32>
    %c0_18 = arith.constant 0 : index
    %c0_19 = arith.constant 0 : index
    %22 = vector.load %arg7[%c0_18, %c0_19] : memref<4x1xf32, #tpu.memory_space<vmem>>, vector<4x1xf32>
    tpu.vector_store %arg7[%c0_18, %c0_19], %21 {strides = array<i32>} : memref<4x1xf32, #tpu.memory_space<vmem>>, vector<4x1xf32>,
    %c0_20 = arith.constant 0 : index
    %c0_21 = arith.constant 0 : index
    %23 = vector.load %arg8[%c0_20, %c0_21] : memref<4x1xf32, #tpu.memory_space<vmem>>, vector<4x1xf32>
    %24 = arith.mulf %4, %4 : vector<4x256xf32>
    %cst_22 = arith.constant dense<0.000000e+00> : vector<4xf32>
    %25 = vector.multi_reduction <add>, %24, %cst_22 [1] : vector<4x256xf32> to vector<4xf32>
    %26 = vector.shape_cast %25 : vector<4xf32> to vector<4x1xf32>
    %27 = arith.addf %23, %26 : vector<4x1xf32>
    %c0_23 = arith.constant 0 : index
    %c0_24 = arith.constant 0 : index
    %28 = vector.load %arg8[%c0_23, %c0_24] : memref<4x1xf32, #tpu.memory_space<vmem>>, vector<4x1xf32>
    tpu.vector_store %arg8[%c0_23, %c0_24], %27 {strides = array<i32>} : memref<4x1xf32, #tpu.memory_space<vmem>>, vector<4x1xf32>,
    %c0_25 = arith.constant 0 : index
    %c0_26 = arith.constant 0 : index
    %29 = vector.load %arg9[%c0_25, %c0_26] : memref<4x1xf32, #tpu.memory_space<vmem>>, vector<4x1xf32>
    %30 = arith.mulf %6, %6 : vector<4x256xf32>
    %cst_27 = arith.constant dense<0.000000e+00> : vector<4xf32>
    %31 = vector.multi_reduction <add>, %30, %cst_27 [1] : vector<4x256xf32> to vector<4xf32>
    %32 = vector.shape_cast %31 : vector<4xf32> to vector<4x1xf32>
    %33 = arith.addf %29, %32 : vector<4x1xf32>
    %c0_28 = arith.constant 0 : index
    %c0_29 = arith.constant 0 : index
    %34 = vector.load %arg9[%c0_28, %c0_29] : memref<4x1xf32, #tpu.memory_space<vmem>>, vector<4x1xf32>
    tpu.vector_store %arg9[%c0_28, %c0_29], %33 {strides = array<i32>} : memref<4x1xf32, #tpu.memory_space<vmem>>, vector<4x1xf32>,
    %c0_i32_30 = arith.constant 0 : i32
    %35 = arith.cmpi eq, %arg1, %c0_i32_30 : i32
    %36 = arith.extui %35 : i1 to i32
    %c0_i32_31 = arith.constant 0 : i32
    %37 = arith.cmpi ne, %36, %c0_i32_31 : i32
    scf.if %37 {
      %c0_32 = arith.constant 0 : index
      %c0_33 = arith.constant 0 : index
      %38 = vector.load %arg5[%c0_32, %c0_33] : memref<4x1xf32, #tpu.memory_space<vmem>>, vector<4x1xf32>
      %c0_34 = arith.constant 0 : index
      %c0_35 = arith.constant 0 : index
      %39 = vector.load %arg6[%c0_34, %c0_35] : memref<4x1xf32, #tpu.memory_space<vmem>>, vector<4x1xf32>
      %c0_36 = arith.constant 0 : index
      %c0_37 = arith.constant 0 : index
      %40 = vector.load %arg7[%c0_36, %c0_37] : memref<4x1xf32, #tpu.memory_space<vmem>>, vector<4x1xf32>
      %41 = arith.mulf %38, %39 : vector<4x1xf32>
      %cst_38 = arith.constant 3.906250e-03 : f32
      %42 = vector.broadcast %cst_38 : f32 to vector<4x1xf32>
      %43 = arith.mulf %41, %42 : vector<4x1xf32>
      %44 = arith.subf %40, %43 : vector<4x1xf32>
      %c0_39 = arith.constant 0 : index
      %c0_40 = arith.constant 0 : index
      %45 = vector.load %arg8[%c0_39, %c0_40] : memref<4x1xf32, #tpu.memory_space<vmem>>, vector<4x1xf32>
      %46 = arith.mulf %38, %38 : vector<4x1xf32>
      %cst_41 = arith.constant 3.906250e-03 : f32
      %47 = vector.broadcast %cst_41 : f32 to vector<4x1xf32>
      %48 = arith.mulf %46, %47 : vector<4x1xf32>
      %49 = arith.subf %45, %48 : vector<4x1xf32>
      %cst_42 = arith.constant 0.000000e+00 : f32
      %50 = vector.broadcast %cst_42 : f32 to vector<4x1xf32>
      %51 = arith.maximumf %49, %50 : vector<4x1xf32>
      %c0_43 = arith.constant 0 : index
      %c0_44 = arith.constant 0 : index
      %52 = vector.load %arg9[%c0_43, %c0_44] : memref<4x1xf32, #tpu.memory_space<vmem>>, vector<4x1xf32>
      %53 = arith.mulf %39, %39 : vector<4x1xf32>
      %cst_45 = arith.constant 3.906250e-03 : f32
      %54 = vector.broadcast %cst_45 : f32 to vector<4x1xf32>
      %55 = arith.mulf %53, %54 : vector<4x1xf32>
      %56 = arith.subf %52, %55 : vector<4x1xf32>
      %cst_46 = arith.constant 0.000000e+00 : f32
      %57 = vector.broadcast %cst_46 : f32 to vector<4x1xf32>
      %58 = arith.maximumf %56, %57 : vector<4x1xf32>
      %59 = arith.mulf %51, %58 : vector<4x1xf32>
      %60 = math.rsqrt %59 : vector<4x1xf32>
      %61 = arith.mulf %44, %60 : vector<4x1xf32>
      %62 = vector.shape_cast %61 : vector<4x1xf32> to vector<1x4x1xf32>
      %cst_47 = arith.constant dense<0.000000e+00> : vector<1xf32>
      %63 = vector.multi_reduction <add>, %62, %cst_47 [1, 2] : vector<1x4x1xf32> to vector<1xf32>
      %64 = vector.shape_cast %63 : vector<1xf32> to vector<1x1x1xf32>
      %65 = vector.extract %64[0, 0, 0] : f32 from vector<1x1x1xf32>
      %66 = vector.broadcast %65 : f32 to vector<1x1xf32>
      %cst_48 = arith.constant 2.500000e-01 : f32
      %67 = vector.broadcast %cst_48 : f32 to vector<1x1xf32>
      %68 = arith.mulf %66, %67 : vector<1x1xf32>
      %cst_49 = arith.constant 1.000000e+00 : f32
      %69 = vector.broadcast %cst_49 : f32 to vector<1x1xf32>
      %70 = arith.subf %69, %68 : vector<1x1xf32>
      %c0_50 = arith.constant 0 : index
      %c0_51 = arith.constant 0 : index
      %c0_52 = arith.constant 0 : index
      %71 = vector.load %arg4[%c0_50, %c0_51, %c0_52] : memref<1x1x1xf32, #tpu.memory_space<vmem>>, vector<1x1x1xf32>
      %72 = vector.shape_cast %71 : vector<1x1x1xf32> to vector<1x1xf32>
      %73 = vector.shape_cast %70 : vector<1x1xf32> to vector<1x1x1xf32>
      tpu.vector_store %arg4[%c0_50, %c0_51, %c0_52], %73 {strides = array<i32>} : memref<1x1x1xf32, #tpu.memory_space<vmem>>, vector<1x1x1xf32>,
    } else {
    }
    return
  }
  func.func @transform_0(%arg0: i32, %arg1: i32) -> (i32, i32, i32) {
    %c0_i32 = arith.constant 0 : i32
    %c0_i32_0 = arith.constant 0 : i32
    return %arg0, %c0_i32, %arg1 : i32, i32, i32
  }
  func.func @transform_1(%arg0: i32, %arg1: i32) -> (i32, i32, i32) {
    %c0_i32 = arith.constant 0 : i32
    %c0_i32_0 = arith.constant 0 : i32
    return %arg0, %c0_i32, %arg1 : i32, i32, i32
  }
  func.func @transform_2(%arg0: i32, %arg1: i32) -> (i32, i32, i32) {
    %c0_i32 = arith.constant 0 : i32
    %c0_i32_0 = arith.constant 0 : i32
    %c0_i32_1 = arith.constant 0 : i32
    return %arg0, %c0_i32, %c0_i32_0 : i32, i32, i32
  }
}

</mosaic_0001>

<llo_original>
// kernel: tpu_custom_call.1
$region0: #{tpu_custom_call.1}
  #allocation0 [shape = 'u32[]', space=smem, size = 0x4, offset = 0x4, fixed_abs, tag = 'smem constant byte address 0x4 - core index']
  #allocation1 [shape = 'u32[144,128]{1,0:T(1,128)}', space=vmem, size = 0x12000, scoped, tag = 'internal scratch']
  #allocation2 [shape = 'f32[4,1]{1,0:T(4,128)}', space=vmem, size = 0x800, scoped, tag = 'scratch operand']
  #allocation3 [shape = 'f32[4,1]{1,0:T(4,128)}', space=vmem, size = 0x800, scoped, tag = 'scratch operand']
  #allocation4 [shape = 'f32[4,1]{1,0:T(4,128)}', space=vmem, size = 0x800, scoped, tag = 'scratch operand']
  #allocation5 [shape = 'f32[4,1]{1,0:T(4,128)}', space=vmem, size = 0x800, scoped, tag = 'scratch operand']
  #allocation6 [shape = 'f32[4,1]{1,0:T(4,128)}', space=vmem, size = 0x800, scoped, tag = 'scratch operand']
  %s0 = inlined_call_operand.hbm [shape: f32[2,4,256], index: 0, kind: input, shape index: {}]
  %s1 = inlined_call_operand.hbm [shape: f32[2,4,256], index: 1, kind: input, shape index: {}]
  %s2 = inlined_call_operand.vmem [shape: f32[2,1,1], index: 2, kind: output, shape index: {}]
  %s3 = sld [smem:[#allocation0]]
  $region57: #{tpu_custom_call.1} parent=0
    _
  %s5 = ssub.s32 1, %s3
  %s6 = scalar_select 0, %s5, %s3
  $region1: #{tpu_custom_call.1} parent=0
    #allocation7 [shape = 'u8[8192]{0}', space=vmem, size = 0x2000, scoped, tag = 'input window, operand 0']
    #allocation8 [shape = 's32[2]{0}', space=sflag, size = 0x8, scoped, tag = 'scoped memory for tpu_custom_call.1']
    #allocation9 [shape = 'u8[8192]{0}', space=vmem, size = 0x2000, scoped, tag = 'input window, operand 1']
    #allocation10 [shape = 's32[2]{0}', space=sflag, size = 0x8, scoped, tag = 'scoped memory for tpu_custom_call.1']
    %7 = vsyncpa [#allocation8], 0
    %s8 = scalar_lea.sflag [#allocation8], 1
    %9 = vsyncpa %s8, 0
    %10 = vsyncpa [#allocation10], 0
    %s11 = scalar_lea.sflag [#allocation10], 1
    %12 = vsyncpa %s11, 0
    loop: start=0, step=1, limit=4
    $region2: #{tpu_custom_call.1} parent=1 // loop_pre_header
      _
    $region3: #{tpu_custom_call.1} parent=1 // loop_header
      %s14 = sphi 0, %s18
      %p15 = scmp.ge.s32.totalorder %s14, 4
      %s21 = sphi 0, %s33
      %s22 = sphi 0, %s29
      %s23 = sphi 0, %s21
      %s24 = sphi 0, %s22
      %s25 = sphi 0, %s23
      %s26 = sphi 0, %s24
      %s38 = sphi 0, %s40
      %s41 = sphi 0, %s38
      %s42 = sphi 0, %s41
      %s58 = sphi 0, %s42
      %s66 = sphi 0, %s68
      %s69 = sphi 0, %s66
      %s70 = sphi 0, %s69
      %s86 = sphi 0, %s70
      %s92 = sphi 0, %s94
      %s95 = sphi 0, %s92
      %s96 = sphi 0, %s95
      %s112 = sphi 0, %s96
    $region4: #{tpu_custom_call.1} parent=1 // loop_header_branch
      %17 = sbr.rel (%p15) target = $region8
    $region5: #{tpu_custom_call.1} parent=1 // loop_body
      %s19 = ssub.s32 %s14, 1
      %s20 = ssub.s32 %s14, 2
      %s27 = sadd.s32 1, %s22
      %p28 = scmp.ge.s32.totalorder %s27, 1
      %s29 = scalar_select %p28, 0, %s27
      %s30 = sadd.s32 1, %s21
      %s31 = scalar_select %p28, %s30, %s21
      %p32 = scmp.ge.s32.totalorder %s31, 2
      %s33 = scalar_select %p32, 0, %s31
      %s34 = ssub.s32 %s21, %s33
      %s35 = ssub.s32 %s22, %s29
      %s36 = sor.u32 %s34, %s35
      %p37 = scmp.eq.s32.totalorder %s36, 0
      %s39 = sadd.s32 %s38, 1
      %s40 = scalar_select %p37, %s38, %s39
      %p43 = pneg %p37
      %p44 = scmp.eq.s32.totalorder %s14, 1
      %p45 = por %p43, %p44
      %p46 = scmp.ne.s32.totalorder %s38, %s41
      %p47 = scmp.eq.s32.totalorder %s14, 0
      %p48 = por %p46, %p47
      %p49 = scmp.ne.s32.totalorder %s38, %s41
      %p50 = scmp.eq.s32.totalorder %s19, 1
      %p51 = por %p49, %p50
      %p52 = scmp.ne.s32.totalorder %s41, %s42
      %p53 = scmp.eq.s32.totalorder %s19, 0
      %p54 = por %p52, %p53
      %p55 = scmp.ne.s32.totalorder %s41, %s42
      %p56 = scmp.eq.s32.totalorder %s20, 1
      %p57 = por %p55, %p56
      %p59 = scmp.ne.s32.totalorder %s42, %s58
      %p60 = scmp.eq.s32.totalorder %s20, 0
      %p61 = por %p59, %p60
      %s62 = ssub.s32 %s21, %s33
      %s63 = ssub.s32 %s22, %s29
      %s64 = sor.u32 %s62, %s63
      %p65 = scmp.eq.s32.totalorder %s64, 0
      %s67 = sadd.s32 %s66, 1
      %s68 = scalar_select %p65, %s66, %s67
      %p71 = pneg %p65
      %p72 = scmp.eq.s32.totalorder %s14, 1
      %p73 = por %p71, %p72
      %p74 = scmp.ne.s32.totalorder %s66, %s69
      %p75 = scmp.eq.s32.totalorder %s14, 0
      %p76 = por %p74, %p75
      %p77 = scmp.ne.s32.totalorder %s66, %s69
      %p78 = scmp.eq.s32.totalorder %s19, 1
      %p79 = por %p77, %p78
      %p80 = scmp.ne.s32.totalorder %s69, %s70
      %p81 = scmp.eq.s32.totalorder %s19, 0
      %p82 = por %p80, %p81
      %p83 = scmp.ne.s32.totalorder %s69, %s70
      %p84 = scmp.eq.s32.totalorder %s20, 1
      %p85 = por %p83, %p84
      %p87 = scmp.ne.s32.totalorder %s70, %s86
      %p88 = scmp.eq.s32.totalorder %s20, 0
      %p89 = por %p87, %p88
      %s90 = ssub.s32 %s21, %s33
      %p91 = scmp.eq.s32.totalorder %s90, 0
      %s93 = sadd.s32 %s92, 1
      %s94 = scalar_select %p91, %s92, %s93
      %p97 = pneg %p91
      %p98 = scmp.eq.s32.totalorder %s14, 1
      %p99 = por %p97, %p98
      %p100 = scmp.ne.s32.totalorder %s92, %s95
      %p101 = scmp.eq.s32.totalorder %s14, 0
      %p102 = por %p100, %p101
      %p103 = scmp.ne.s32.totalorder %s92, %s95
      %p104 = scmp.eq.s32.totalorder %s19, 1
      %p105 = por %p103, %p104
      %p106 = scmp.ne.s32.totalorder %s95, %s96
      %p107 = scmp.eq.s32.totalorder %s19, 0
      %p108 = por %p106, %p107
      %p109 = scmp.ne.s32.totalorder %s95, %s96
      %p110 = scmp.eq.s32.totalorder %s20, 1
      %p111 = por %p109, %p110
      %p113 = scmp.ne.s32.totalorder %s96, %s112
      %p114 = scmp.eq.s32.totalorder %s20, 0
      %p115 = por %p113, %p114
      %p116 = scmp.le.s32.totalorder 1, %s14
      %p117 = scmp.lt.s32.totalorder %s14, 3
      %p118 = pnand %p116, %p117
      %p119 = pneg %p118
      // Predicated region
      $region9: #{tpu_custom_call.1} parent=5 // pred_check
        _
      $region10: #{tpu_custom_call.1} parent=5 // pred_check_branch
        %121 = sbr.rel (%p118) target = $region12
      $region11: #{tpu_custom_call.1} parent=5 // pred_region
        %s122 = ssub.s32 %s14, 1
      $region12: #{tpu_custom_call.1} parent=5 // pred_fallthru
        _
      %p123 = scmp.lt.s32.totalorder %s14, 2
      // Predicated region
      $region13: #{tpu_custom_call.1} parent=5 // pred_check
        %p124 = pneg %p123
      $region14: #{tpu_custom_call.1} parent=5 // pred_check_branch
        %126 = sbr.rel (%p124) target = $region16
      $region15: #{tpu_custom_call.1} parent=5 // pred_region
        // Predicated region
        $region17: #{tpu_custom_call.1} parent=15 // pred_check
          %p127 = pneg %p48
        $region18: #{tpu_custom_call.1} parent=15 // pred_check_branch
          %129 = sbr.rel (%p127) target = $region20
        $region19: #{tpu_custom_call.1} parent=15 // pred_region
          %s130 = sand.u32 %s38, 1
          %s131 = scalar_lea.sflag [#allocation8], %s130
          %s132 = sand.u32 %s38, 1
          %s133 = smul.addr %s132, 8
          %s134 = scalar_lea.vmem [#allocation7], %s133
          %s135 = smul.u32 2, %s22
          %s137 = ssub.s32 128, 128
          %138 = vsyncadd %s131, %s137
          %s139 = smul.addr %s21, 2
          %s140 = sadd.s32 %s135, %s139
          %s141 = smul.addr %s140, 64
          %s142 = scalar_lea.hbm %s0, %s141
          %s144 = sshll.u32 %s134, 4
          %s145 = int_to_ptr.vmem [resolvable:$true] %s144
          %147 = dma.hbm_to_vmem [thread:$0]  %s142, 128, %s145, %s131
        $region20: #{tpu_custom_call.1} parent=15 // pred_fallthru
          _
        // Predicated region
        $region21: #{tpu_custom_call.1} parent=15 // pred_check
          %p148 = pneg %p76
        $region22: #{tpu_custom_call.1} parent=15 // pred_check_branch
          %150 = sbr.rel (%p148) target = $region24
        $region23: #{tpu_custom_call.1} parent=15 // pred_region
          %s151 = sand.u32 %s66, 1
          %s152 = scalar_lea.sflag [#allocation10], %s151
          %s153 = sand.u32 %s66, 1
          %s154 = smul.addr %s153, 8
          %s155 = scalar_lea.vmem [#allocation9], %s154
          %s156 = smul.u32 2, %s22
          %s158 = ssub.s32 128, 128
          %159 = vsyncadd %s152, %s158
          %s160 = smul.addr %s21, 2
          %s161 = sadd.s32 %s156, %s160
          %s162 = smul.addr %s161, 64
          %s163 = scalar_lea.hbm %s1, %s162
          %s165 = sshll.u32 %s155, 4
          %s166 = int_to_ptr.vmem [resolvable:$true] %s165
          %168 = dma.hbm_to_vmem [thread:$0]  %s163, 128, %s166, %s152
        $region24: #{tpu_custom_call.1} parent=15 // pred_fallthru
          _
      $region16: #{tpu_custom_call.1} parent=5 // pred_fallthru
        _
      %p169 = scmp.le.s32.totalorder 1, %s14
      %p170 = scmp.lt.s32.totalorder %s14, 3
      %p171 = pnand %p169, %p170
      %p172 = pneg %p171
      // Predicated region
      $region25: #{tpu_custom_call.1} parent=5 // pred_check
        _
      $region26: #{tpu_custom_call.1} parent=5 // pred_check_branch
        %174 = sbr.rel (%p171) target = $region28
      $region27: #{tpu_custom_call.1} parent=5 // pred_region
        %s175 = ssub.s32 %s14, 1
        %s176 = sand.u32 %s41, 1
        %s177 = scalar_lea.sflag [#allocation8], %s176
        %s178 = sand.u32 %s41, 1
        %s179 = smul.addr %s178, 8
        %s180 = scalar_lea.vmem [#allocation7], %s179
        // Predicated region
        $region29: #{tpu_custom_call.1} parent=27 // pred_check
          %p181 = pneg %p54
        $region30: #{tpu_custom_call.1} parent=27 // pred_check_branch
          %183 = sbr.rel (%p181) target = $region32
        $region31: #{tpu_custom_call.1} parent=27 // pred_region
          %184 = dma.done %s177, 128
        $region32: #{tpu_custom_call.1} parent=27 // pred_fallthru
          _
        %s185 = sand.u32 %s69, 1
        %s186 = scalar_lea.sflag [#allocation10], %s185
        %s187 = sand.u32 %s69, 1
        %s188 = smul.addr %s187, 8
        %s189 = scalar_lea.vmem [#allocation9], %s188
        // Predicated region
        $region33: #{tpu_custom_call.1} parent=27 // pred_check
          %p190 = pneg %p82
        $region34: #{tpu_custom_call.1} parent=27 // pred_check_branch
          %192 = sbr.rel (%p190) target = $region36
        $region35: #{tpu_custom_call.1} parent=27 // pred_region
          %193 = dma.done %s186, 128
        $region36: #{tpu_custom_call.1} parent=27 // pred_fallthru
          _
        %s194 = sand.u32 %s41, 1
        %s195 = scalar_lea.sflag [#allocation8], %s194
        %s196 = sand.u32 %s41, 1
        %s197 = smul.addr %s196, 8
        %s198 = scalar_lea.vmem [#allocation7], %s197
        %p199 = pneg %p54
        %p200 = pneg %p51
        %s201 = sand.u32 %s69, 1
        %s202 = scalar_lea.sflag [#allocation10], %s201
        %s203 = sand.u32 %s69, 1
        %s204 = smul.addr %s203, 8
        %s205 = scalar_lea.vmem [#allocation9], %s204
        %p206 = pneg %p82
        %p207 = pneg %p79
        %p208 = pneg %p108
        %p209 = pneg %p105
        %p210 = scmp.lt.s32.totalorder %s23, 1
        %s211 = scalar_select %p210, %s23, 1
        %s212 = scalar_lea.vmem %s2, %s211
        %s213 = smul.u32 2, %s24
        %s214 = smul.u32 2, %s24
        %p215 = scmp.lt.s32.totalorder %s23, 1
        %s216 = scalar_select %p215, %s23, 1
        %s217 = scalar_lea.vmem %s2, %s216
        %p218 = scmp.eq.s32.totalorder %s24, 0
        // Predicated region
        $region37: #{tpu_custom_call.1} parent=27 // pred_check
          %p219 = pneg %p218
        $region38: #{tpu_custom_call.1} parent=27 // pred_check_branch
          %221 = sbr.rel (%p219) target = $region40
        $region39: #{tpu_custom_call.1} parent=27 // pred_region
          %vm222 = vcmask 3072
          %223 = vst.msk [vmem:[#allocation2] sm:$0xf] %vm222, 0.0
          %224 = vst.msk [vmem:[#allocation3] sm:$0xf] %vm222, 0.0
          %225 = vst.msk [vmem:[#allocation4] sm:$0xf] %vm222, 0.0
          %226 = vst.msk [vmem:[#allocation5] sm:$0xf] %vm222, 0.0
          %227 = vst.msk [vmem:[#allocation6] sm:$0xf] %vm222, 0.0
        $region40: #{tpu_custom_call.1} parent=27 // pred_fallthru
          _
        %v228 = vld [vmem:[%s180] sm:$0xff]
        %v229 = vld [vmem:[%s189] sm:$0xff]
        %v230 = vld [vmem:[#allocation2] sm:$0xf]
        %v232 = vcombine.high %v228, %v228
        %vm234 = vcmask 1043456
        %v235 = vsel %vm234, %v228, 0.0
        %v236 = vsel %vm234, %v232, 0.0
        %v237 = vadd.f32 %v235, %v236
        %238 = vadd.xlane.f32.xlu0 %v237
        %v239 = vpop.xlane.xlu0 %238
        %v240 = vadd.f32 %v230, %v239
        %vm241 = vcmask 3072
        %242 = vst.msk [vmem:[#allocation2] sm:$0xf] %vm241, %v240
        %v243 = vld [vmem:[#allocation3] sm:$0xf]
        %v245 = vcombine.high %v229, %v229
        %v247 = vsel %vm234, %v229, 0.0
        %v248 = vsel %vm234, %v245, 0.0
        %v249 = vadd.f32 %v247, %v248
        %250 = vadd.xlane.f32.xlu0 %v249
        %v251 = vpop.xlane.xlu0 %250
        %v252 = vadd.f32 %v243, %v251
        %253 = vst.msk [vmem:[#allocation3] sm:$0xf] %vm241, %v252
        %v254 = vld [vmem:[#allocation4] sm:$0xf]
        %v255 = vmul.f32 %v228, %v229
        %v257 = vcombine.high %v255, %v255
        %v259 = vsel %vm234, %v255, 0.0
        %v260 = vsel %vm234, %v257, 0.0
        %v261 = vadd.f32 %v259, %v260
        %262 = vadd.xlane.f32.xlu0 %v261
        %v263 = vpop.xlane.xlu0 %262
        %v264 = vadd.f32 %v254, %v263
        %265 = vst.msk [vmem:[#allocation4] sm:$0xf] %vm241, %v264
        %v266 = vld [vmem:[#allocation5] sm:$0xf]
        %v267 = vmul.f32 %v228, %v228
        %v269 = vcombine.high %v267, %v267
        %v271 = vsel %vm234, %v267, 0.0
        %v272 = vsel %vm234, %v269, 0.0
        %v273 = vadd.f32 %v271, %v272
        %274 = vadd.xlane.f32.xlu0 %v273
        %v275 = vpop.xlane.xlu0 %274
        %v276 = vadd.f32 %v266, %v275
        %277 = vst.msk [vmem:[#allocation5] sm:$0xf] %vm241, %v276
        %v278 = vld [vmem:[#allocation6] sm:$0xf]
        %v279 = vmul.f32 %v229, %v229
        %v281 = vcombine.high %v279, %v279
        %v283 = vsel %vm234, %v279, 0.0
        %v284 = vsel %vm234, %v281, 0.0
        %v285 = vadd.f32 %v283, %v284
        %286 = vadd.xlane.f32.xlu0 %v285
        %v287 = vpop.xlane.xlu0 %286
        %v288 = vadd.f32 %v278, %v287
        %289 = vst.msk [vmem:[#allocation6] sm:$0xf] %vm241, %v288
        // Predicated region
        $region41: #{tpu_custom_call.1} parent=27 // pred_check
          %p290 = pneg %p218
        $region42: #{tpu_custom_call.1} parent=27 // pred_check_branch
          %292 = sbr.rel (%p290) target = $region44
        $region43: #{tpu_custom_call.1} parent=27 // pred_region
          %v293 = vld [vmem:[#allocation2] sm:$0xf]
          %v294 = vld [vmem:[#allocation3] sm:$0xf]
          %v295 = vld [vmem:[#allocation4] sm:$0xf]
          %v296 = vmul.f32 %v293, %v294
          %v297 = vmul.f32 %v296, 0.00390625
          %v298 = vsub.f32 %v295, %v297
          %v299 = vld [vmem:[#allocation5] sm:$0xf]
          %v300 = vmul.f32 %v293, %v293
          %v301 = vmul.f32 %v300, 0.00390625
          %v302 = vsub.f32 %v299, %v301
          %v303 = vmax.f32 %v302, 0.0
          %v304 = vld [vmem:[#allocation6] sm:$0xf]
          %v305 = vmul.f32 %v294, %v294
          %v306 = vmul.f32 %v305, 0.00390625
          %v307 = vsub.f32 %v304, %v306
          %v308 = vmax.f32 %v307, 0.0
          %v309 = vmul.f32 %v303, %v308
          %v310 = vrsqrt.pop %v309
          %v311 = vmul.f32 %v298, %v310
          %v312 = vsel %vm241, %v311, 0.0
          %313 = vadd.xlane.f32.xlu0 %v312
          %v314 = vpop.xlane.xlu0 %313
          %v315 = vrot.slane %v314, 4
          %v316 = vadd.f32 %v314, %v315
          %v317 = vrot.slane %v316, 2
          %v318 = vadd.f32 %v316, %v317
          %v319 = vrot.slane %v318, 1
          %v320 = vadd.f32 %v318, %v319
          %s321 = vtos %v320
          %v322 = vstv %s321
          %v323 = vmul.f32 %v322, 0.25
          %v324 = vsub.f32 1.0, %v323
          %vm325 = vcmask 0
          %326 = vst.msk [vmem:[%s217] sm:$0x1] %vm325, %v324
        $region44: #{tpu_custom_call.1} parent=27 // pred_fallthru
          _
        %p327 = scmp.lt.s32.totalorder %s23, 1
        %s328 = scalar_select %p327, %s23, 1
        %s329 = scalar_lea.vmem %s2, %s328
        // Predicated region
        $region45: #{tpu_custom_call.1} parent=27 // pred_check
          %p330 = pneg %p105
        $region46: #{tpu_custom_call.1} parent=27 // pred_check_branch
          %332 = sbr.rel (%p330) target = $region48
        $region47: #{tpu_custom_call.1} parent=27 // pred_region
          _
        $region48: #{tpu_custom_call.1} parent=27 // pred_fallthru
          _
      $region28: #{tpu_custom_call.1} parent=5 // pred_fallthru
        _
      %p333 = scmp.le.s32.totalorder 2, %s14
      // Predicated region
      $region49: #{tpu_custom_call.1} parent=5 // pred_check
        %p334 = pneg %p333
      $region50: #{tpu_custom_call.1} parent=5 // pred_check_branch
        %336 = sbr.rel (%p334) target = $region52
      $region51: #{tpu_custom_call.1} parent=5 // pred_region
        %s337 = ssub.s32 %s14, 2
        // Predicated region
        $region53: #{tpu_custom_call.1} parent=51 // pred_check
          %p338 = pneg %p111
        $region54: #{tpu_custom_call.1} parent=51 // pred_check_branch
          %340 = sbr.rel (%p338) target = $region56
        $region55: #{tpu_custom_call.1} parent=51 // pred_region
          %p341 = scmp.lt.s32.totalorder %s25, 1
          %s342 = scalar_select %p341, %s25, 1
          %s343 = scalar_lea.vmem %s2, %s342
        $region56: #{tpu_custom_call.1} parent=51 // pred_fallthru
          _
      $region52: #{tpu_custom_call.1} parent=5 // pred_fallthru
        _
    $region6: #{tpu_custom_call.1} parent=1 // loop_footer
      %s18 = sadd.s32 1, %s14
    $region7: #{tpu_custom_call.1} parent=1 // loop_footer_branch
      %13 = sbr.rel target = $region3
    $region8: #{tpu_custom_call.1} parent=1 // loop_exit
      _
    %344 = vsyncpa [#allocation8], 1
    %s345 = scalar_lea.sflag [#allocation8], 1
    %346 = vsyncpa %s345, 1
    %347 = vsyncpa [#allocation10], 1
    %s348 = scalar_lea.sflag [#allocation10], 1
    %349 = vsyncpa %s348, 1

</llo_original>
